<compile_context>
chip_gen: v5e
topology: v5e:2x2
jax: 0.10.0
libtpu: 0.0.40
codegen_flags: <defaults>
</compile_context>

<pallas_src>
import functools

import jax
import jax.numpy as jnp
from jax.experimental import pallas as pl
from jax.experimental.pallas import tpu as pltpu

_LANE = 128


def _pixelnorm_kernel(x_ref, o_ref, *, eps, scale_in_out_dtype):
    # Block is (BLOCK_N, C, TILE_HW) or (BLOCK_N, C, TILE_S, 128); the channel
    # reduction is axis=1 in both layouts, per-sample and per-lane, so batch /
    # spatial tiling (including padded tail blocks) never mixes statistics.
    x = x_ref[...]
    xf = x.astype(jnp.float32)
    ms = jnp.mean(xf * xf, axis=1, keepdims=True)
    inv = jax.lax.rsqrt(ms + eps)              # EUP rsqrt (free slot)
    if scale_in_out_dtype:
        # bf16 store path: scale in the output dtype, skip the f32 round trip.
        o_ref[...] = x * inv.astype(o_ref.dtype)
    else:
        o_ref[...] = (xf * inv).astype(o_ref.dtype)


def _vmem_capacity_bytes():
    try:
        return int(pltpu.get_tpu_info().vmem_capacity_bytes)
    except Exception:
        return 64 * 1024 * 1024          # conservative: assume v7x (64 MiB/TC)


def _budget():
    """(target block bytes, scoped VMEM limit) per TPU generation."""
    if _vmem_capacity_bytes() >= 100 * 1024 * 1024:     # v5e / v6e: 128 MiB
        return 8 * 1024 * 1024, 96 * 1024 * 1024
    return 4 * 1024 * 1024, 48 * 1024 * 1024            # v7x: 64 MiB physical


def _pick_blocks_4d(N, C, S, itemsize, target_bytes):
    """Blocks for the (N, C, S, 128) layout: returns (block_n, tile_s)."""
    slab_bytes = C * _LANE * itemsize            # one sublane row, all channels
    max_s = max(1, target_bytes // slab_bytes)
    if S <= max_s:
        tile_s = S                               # full sublane dim is allowed
    else:
        tile_s = max(8, (max_s // 8) * 8)        # multiple of 8 (sublane rule)
        for cand in range(tile_s, 7, -8):        # prefer no ragged tail
            if S % cand == 0:
                tile_s = cand
                break

    block_n = 1
    if tile_s == S:
        block_bytes = slab_bytes * S
        block_n = int(max(1, min(N, target_bytes // max(1, block_bytes))))

    # Keep >= 2 grid steps so both v7x TensorCores get work.
    if N >= 2:
        block_n = min(block_n, pl.cdiv(N, 2))
    elif tile_s == S and S >= 16:
        tile_s = max(8, (S // 2 // 8) * 8)
    return block_n, tile_s


def _pick_blocks_3d(N, C, HW, itemsize, target_bytes):
    """Blocks for the (N, C, HW) fallback layout: returns (block_n, tile_hw)."""
    sub_mult = 8 * (4 // itemsize)               # f32: 8, bf16: 16, int8: 32
    padded_c = pl.cdiv(C, sub_mult) * sub_mult   # real VMEM rows incl. padding

    if HW <= _LANE:
        # TODO(synk): <128-lane blocks give masked vst.msk stores; tiny maps
        # only, acceptable — use plain XLA if these layers ever dominate.
        tile_hw = HW
    else:
        lanes = target_bytes // (padded_c * itemsize)
        lanes = max(_LANE, (lanes // _LANE) * _LANE)
        if lanes >= HW:
            tile_hw = HW
        else:
            tile_hw = lanes
            for cand in range(lanes, _LANE - 1, -_LANE):
                if HW % cand == 0:
                    tile_hw = cand
                    break

    block_n = 1
    block_bytes = padded_c * tile_hw * itemsize
    if tile_hw == HW and block_bytes < target_bytes:
        block_n = int(max(1, min(N, target_bytes // max(1, block_bytes))))
    if N >= 2:
        block_n = min(block_n, pl.cdiv(N, 2))
    return block_n, tile_hw


def pixel_norm(x, eps=1e-8):
    """x: (N, C, H, W) array (PyTorch NCHW convention)."""
    N, C, H, W = x.shape
    HW = H * W
    itemsize = jnp.dtype(x.dtype).itemsize
    target_bytes, vmem_limit = _budget()
    scale_in_out_dtype = (x.dtype == jnp.bfloat16)

    # Use the sublane-padding-free 4-D layout when the last dim folds cleanly
    # into 128 lanes and at least one 8-sublane slab fits the budget.
    use_4d = (HW % _LANE == 0) and (C * 8 * _LANE * itemsize <= target_bytes)

    if use_4d:
        S = HW // _LANE
        xr = x.reshape(N, C, S, _LANE)
        block_n, tile_s = _pick_blocks_4d(N, C, S, itemsize, target_bytes)
        grid = (pl.cdiv(N, block_n), pl.cdiv(S, tile_s))
        spec = pl.BlockSpec((block_n, C, tile_s, _LANE),
                            lambda n, s: (n, 0, s, 0))
        out_shape = jax.ShapeDtypeStruct((N, C, S, _LANE), x.dtype)
    else:
        xr = x.reshape(N, C, HW)
        block_n, tile_hw = _pick_blocks_3d(N, C, HW, itemsize, target_bytes)
        grid = (pl.cdiv(N, block_n), pl.cdiv(HW, tile_hw))
        spec = pl.BlockSpec((block_n, C, tile_hw), lambda n, s: (n, 0, s))
        out_shape = jax.ShapeDtypeStruct((N, C, HW), x.dtype)

    out = pl.pallas_call(
        functools.partial(_pixelnorm_kernel, eps=eps,
                          scale_in_out_dtype=scale_in_out_dtype),
        out_shape=out_shape,
        grid=grid,
        in_specs=[spec],
        out_specs=spec,
        compiler_params=pltpu.CompilerParams(
            dimension_semantics=("parallel", "parallel"),
            vmem_limit_bytes=vmem_limit,
        ),
    )(xr)

    return out.reshape(N, C, H, W)


def _ref(x, eps=1e-8):
    xf = x.astype(jnp.float32)
    r = xf / jnp.sqrt(jnp.mean(xf * xf, axis=1, keepdims=True) + eps)
    return r.astype(x.dtype)


if __name__ == "__main__":
    key = jax.random.PRNGKey(0)
    k0, k1, k2 = jax.random.split(key, 3)

    # Main case: NCHW conv feature map, HW a multiple of 128 -> 4-D layout.
    x = jax.random.normal(k0, (2, 4, 16, 16), dtype=jnp.float32)
    y = jax.block_until_ready(pixel_norm(x))
    assert y.shape == x.shape and y.dtype == x.dtype
    assert jnp.max(jnp.abs(y - _ref(x))) < 1e-5

    # Regression: N and HW not divisible by block sizes -> 3-D fallback layout.
    x2 = jax.random.normal(k1, (3, 3, 12, 12), dtype=jnp.float32)
    y2 = jax.block_until_ready(pixel_norm(x2))
    assert y2.shape == x2.shape
    assert jnp.max(jnp.abs(y2 - _ref(x2))) < 1e-5

    # bf16 path (scale done in output dtype).
    x3 = jax.random.normal(k2, (2, 4, 16, 16), dtype=jnp.bfloat16)
    y3 = jax.block_until_ready(pixel_norm(x3))
    assert y3.dtype == jnp.bfloat16
    assert jnp.max(jnp.abs(y3.astype(jnp.float32)
                           - _ref(x3).astype(jnp.float32))) < 5e-2

    print("KERNEL_OK")
</pallas_src>

<mosaic_0001>
module attributes {stable_mosaic.version = 11 : i64} {
  func.func @_pixelnorm_kernel(%arg0: i32, %arg1: i32, %arg2: memref<1x4x2x128xf32, #tpu.memory_space<vmem>>, %arg3: memref<1x4x2x128xf32, #tpu.memory_space<vmem>>) attributes {dimension_semantics = [#tpu.dimension_semantics<parallel>, #tpu.dimension_semantics<parallel>], iteration_bounds = array<i64: 2, 1>, scalar_prefetch = 0 : i64, scratch_operands = 0 : i64, tpu.core_type = #tpu.core_type<tc>, window_params = [{transform_indices = @transform_0, window_bounds = array<i64: 1, 4, 2, 128>}, {transform_indices = @transform_1, window_bounds = array<i64: 1, 4, 2, 128>}]} {
    %c0 = arith.constant 0 : index
    %c0_0 = arith.constant 0 : index
    %c0_1 = arith.constant 0 : index
    %c0_2 = arith.constant 0 : index
    %0 = vector.load %arg2[%c0, %c0_0, %c0_1, %c0_2] : memref<1x4x2x128xf32, #tpu.memory_space<vmem>>, vector<1x4x2x128xf32>
    %1 = arith.mulf %0, %0 : vector<1x4x2x128xf32>
    %cst = arith.constant dense<0.000000e+00> : vector<1x2x128xf32>
    %2 = vector.multi_reduction <add>, %1, %cst [1] : vector<1x4x2x128xf32> to vector<1x2x128xf32>
    %3 = vector.shape_cast %2 : vector<1x2x128xf32> to vector<1x1x2x128xf32>
    %cst_3 = arith.constant 4.000000e+00 : f32
    %4 = vector.broadcast %cst_3 : f32 to vector<1x1x2x128xf32>
    %5 = arith.divf %3, %4 : vector<1x1x2x128xf32>
    %cst_4 = arith.constant 9.99999993E-9 : f32
    %6 = vector.broadcast %cst_4 : f32 to vector<1x1x2x128xf32>
    %7 = arith.addf %5, %6 : vector<1x1x2x128xf32>
    %8 = math.rsqrt %7 : vector<1x1x2x128xf32>
    %9 = vector.broadcast %8 : vector<1x1x2x128xf32> to vector<1x4x2x128xf32>
    %10 = arith.mulf %0, %9 : vector<1x4x2x128xf32>
    %c0_5 = arith.constant 0 : index
    %c0_6 = arith.constant 0 : index
    %c0_7 = arith.constant 0 : index
    %c0_8 = arith.constant 0 : index
    %11 = vector.load %arg3[%c0_5, %c0_6, %c0_7, %c0_8] : memref<1x4x2x128xf32, #tpu.memory_space<vmem>>, vector<1x4x2x128xf32>
    tpu.vector_store %arg3[%c0_5, %c0_6, %c0_7, %c0_8], %10 {strides = array<i32>} : memref<1x4x2x128xf32, #tpu.memory_space<vmem>>, vector<1x4x2x128xf32>,
    return
  }
  func.func @transform_0(%arg0: i32, %arg1: i32) -> (i32, i32, i32, i32) {
    %c0_i32 = arith.constant 0 : i32
    %c0_i32_0 = arith.constant 0 : i32
    %c0_i32_1 = arith.constant 0 : i32
    return %arg0, %c0_i32, %arg1, %c0_i32_0 : i32, i32, i32, i32
  }
  func.func @transform_1(%arg0: i32, %arg1: i32) -> (i32, i32, i32, i32) {
    %c0_i32 = arith.constant 0 : i32
    %c0_i32_0 = arith.constant 0 : i32
    %c0_i32_1 = arith.constant 0 : i32
    return %arg0, %c0_i32, %arg1, %c0_i32_0 : i32, i32, i32, i32
  }
}

</mosaic_0001>

<llo_original>
// kernel: tpu_custom_call.1
$region0: #{tpu_custom_call.1}
  #allocation0 [shape = 'u32[]', space=smem, size = 0x4, offset = 0x4, fixed_abs, tag = 'smem constant byte address 0x4 - core index']
  #allocation1 [shape = 'u32[72,128]{1,0:T(1,128)}', space=vmem, size = 0x9000, scoped, tag = 'internal scratch']
  %s0 = inlined_call_operand.hbm [shape: f32[2,4,2,128], index: 0, kind: input, shape index: {}]
  %s1 = inlined_call_operand.hbm [shape: f32[2,4,2,128], index: 1, kind: output, shape index: {}]
  %s2 = sld [smem:[#allocation0]]
  $region41: #{tpu_custom_call.1} parent=0
    _
  %s4 = ssub.s32 1, %s2
  %s5 = scalar_select 0, %s4, %s2
  $region1: #{tpu_custom_call.1} parent=0
    #allocation2 [shape = 'u8[8192]{0}', space=vmem, size = 0x2000, scoped, tag = 'input window, operand 0']
    #allocation3 [shape = 's32[2]{0}', space=sflag, size = 0x8, scoped, tag = 'scoped memory for tpu_custom_call.1']
    #allocation4 [shape = 's32[2]{0}', space=sflag, size = 0x8, scoped, tag = 'scoped memory for tpu_custom_call.1']
    #allocation5 [shape = 'u8[8192]{0}', space=vmem, size = 0x2000, scoped, tag = 'output window, operand 0']
    %6 = vsyncpa [#allocation3], 0
    %s7 = scalar_lea.sflag [#allocation3], 1
    %8 = vsyncpa %s7, 0
    %9 = vsyncpa [#allocation4], 0
    %s10 = scalar_lea.sflag [#allocation4], 1
    %11 = vsyncpa %s10, 0
    loop: start=0, step=1, limit=4
    $region2: #{tpu_custom_call.1} parent=1 // loop_pre_header
      _
    $region3: #{tpu_custom_call.1} parent=1 // loop_header
      %s13 = sphi 0, %s17
      %p14 = scmp.ge.s32.totalorder %s13, 4
      %s20 = sphi 0, %s32
      %s21 = sphi 0, %s28
      %s22 = sphi 0, %s20
      %s23 = sphi 0, %s21
      %s24 = sphi 0, %s22
      %s25 = sphi 0, %s23
      %s37 = sphi 0, %s39
      %s40 = sphi 0, %s37
      %s41 = sphi 0, %s40
      %s57 = sphi 0, %s41
      %s65 = sphi 0, %s67
      %s68 = sphi 0, %s65
      %s69 = sphi 0, %s68
      %s85 = sphi 0, %s69
    $region4: #{tpu_custom_call.1} parent=1 // loop_header_branch
      %16 = sbr.rel (%p14) target = $region8
    $region5: #{tpu_custom_call.1} parent=1 // loop_body
      %s18 = ssub.s32 %s13, 1
      %s19 = ssub.s32 %s13, 2
      %s26 = sadd.s32 1, %s21
      %p27 = scmp.ge.s32.totalorder %s26, 1
      %s28 = scalar_select %p27, 0, %s26
      %s29 = sadd.s32 1, %s20
      %s30 = scalar_select %p27, %s29, %s20
      %p31 = scmp.ge.s32.totalorder %s30, 2
      %s32 = scalar_select %p31, 0, %s30
      %s33 = ssub.s32 %s20, %s32
      %s34 = ssub.s32 %s21, %s28
      %s35 = sor.u32 %s33, %s34
      %p36 = scmp.eq.s32.totalorder %s35, 0
      %s38 = sadd.s32 %s37, 1
      %s39 = scalar_select %p36, %s37, %s38
      %p42 = pneg %p36
      %p43 = scmp.eq.s32.totalorder %s13, 1
      %p44 = por %p42, %p43
      %p45 = scmp.ne.s32.totalorder %s37, %s40
      %p46 = scmp.eq.s32.totalorder %s13, 0
      %p47 = por %p45, %p46
      %p48 = scmp.ne.s32.totalorder %s37, %s40
      %p49 = scmp.eq.s32.totalorder %s18, 1
      %p50 = por %p48, %p49
      %p51 = scmp.ne.s32.totalorder %s40, %s41
      %p52 = scmp.eq.s32.totalorder %s18, 0
      %p53 = por %p51, %p52
      %p54 = scmp.ne.s32.totalorder %s40, %s41
      %p55 = scmp.eq.s32.totalorder %s19, 1
      %p56 = por %p54, %p55
      %p58 = scmp.ne.s32.totalorder %s41, %s57
      %p59 = scmp.eq.s32.totalorder %s19, 0
      %p60 = por %p58, %p59
      %s61 = ssub.s32 %s20, %s32
      %s62 = ssub.s32 %s21, %s28
      %s63 = sor.u32 %s61, %s62
      %p64 = scmp.eq.s32.totalorder %s63, 0
      %s66 = sadd.s32 %s65, 1
      %s67 = scalar_select %p64, %s65, %s66
      %p70 = pneg %p64
      %p71 = scmp.eq.s32.totalorder %s13, 1
      %p72 = por %p70, %p71
      %p73 = scmp.ne.s32.totalorder %s65, %s68
      %p74 = scmp.eq.s32.totalorder %s13, 0
      %p75 = por %p73, %p74
      %p76 = scmp.ne.s32.totalorder %s65, %s68
      %p77 = scmp.eq.s32.totalorder %s18, 1
      %p78 = por %p76, %p77
      %p79 = scmp.ne.s32.totalorder %s68, %s69
      %p80 = scmp.eq.s32.totalorder %s18, 0
      %p81 = por %p79, %p80
      %p82 = scmp.ne.s32.totalorder %s68, %s69
      %p83 = scmp.eq.s32.totalorder %s19, 1
      %p84 = por %p82, %p83
      %p86 = scmp.ne.s32.totalorder %s69, %s85
      %p87 = scmp.eq.s32.totalorder %s19, 0
      %p88 = por %p86, %p87
      %p89 = scmp.le.s32.totalorder 1, %s13
      %p90 = scmp.lt.s32.totalorder %s13, 3
      %p91 = pnand %p89, %p90
      %p92 = pneg %p91
      // Predicated region
      $region9: #{tpu_custom_call.1} parent=5 // pred_check
        _
      $region10: #{tpu_custom_call.1} parent=5 // pred_check_branch
        %94 = sbr.rel (%p91) target = $region12
      $region11: #{tpu_custom_call.1} parent=5 // pred_region
        %s95 = ssub.s32 %s13, 1
      $region12: #{tpu_custom_call.1} parent=5 // pred_fallthru
        _
      %p96 = scmp.lt.s32.totalorder %s13, 2
      // Predicated region
      $region13: #{tpu_custom_call.1} parent=5 // pred_check
        %p97 = pneg %p96
      $region14: #{tpu_custom_call.1} parent=5 // pred_check_branch
        %99 = sbr.rel (%p97) target = $region16
      $region15: #{tpu_custom_call.1} parent=5 // pred_region
        // Predicated region
        $region17: #{tpu_custom_call.1} parent=15 // pred_check
          %p100 = pneg %p47
        $region18: #{tpu_custom_call.1} parent=15 // pred_check_branch
          %102 = sbr.rel (%p100) target = $region20
        $region19: #{tpu_custom_call.1} parent=15 // pred_region
          %s103 = sand.u32 %s37, 1
          %s104 = scalar_lea.sflag [#allocation3], %s103
          %s105 = sand.u32 %s37, 1
          %s106 = smul.addr %s105, 8
          %s107 = scalar_lea.vmem [#allocation2], %s106
          %109 = vsyncadd %s104, 0
          %s110 = smul.addr %s20, 4
          %s111 = sadd.s32 %s21, %s110
          %s112 = smul.addr %s111, 2
          %s113 = scalar_lea.hbm %s0, %s112
          %s114 = sshll.u32 %s113, 4
          %s115 = int_to_ptr.hbm [resolvable:$true] %s114
          %s116 = sshll.u32 %s107, 4
          %s117 = int_to_ptr.vmem [resolvable:$true] %s116
          %122 = dma.hbm_to_vmem [thread:$0]  %s115, 128, %s117, %s104, 32, 32, 2
        $region20: #{tpu_custom_call.1} parent=15 // pred_fallthru
          _
      $region16: #{tpu_custom_call.1} parent=5 // pred_fallthru
        _
      %p123 = scmp.le.s32.totalorder 1, %s13
      %p124 = scmp.lt.s32.totalorder %s13, 3
      %p125 = pnand %p123, %p124
      %p126 = pneg %p125
      // Predicated region
      $region21: #{tpu_custom_call.1} parent=5 // pred_check
        _
      $region22: #{tpu_custom_call.1} parent=5 // pred_check_branch
        %128 = sbr.rel (%p125) target = $region24
      $region23: #{tpu_custom_call.1} parent=5 // pred_region
        %s129 = ssub.s32 %s13, 1
        %s130 = sand.u32 %s40, 1
        %s131 = scalar_lea.sflag [#allocation3], %s130
        %s132 = sand.u32 %s40, 1
        %s133 = smul.addr %s132, 8
        %s134 = scalar_lea.vmem [#allocation2], %s133
        // Predicated region
        $region25: #{tpu_custom_call.1} parent=23 // pred_check
          %p135 = pneg %p53
        $region26: #{tpu_custom_call.1} parent=23 // pred_check_branch
          %137 = sbr.rel (%p135) target = $region28
        $region27: #{tpu_custom_call.1} parent=23 // pred_region
          %139 = dma.done %s131, 128
        $region28: #{tpu_custom_call.1} parent=23 // pred_fallthru
          _
        %s140 = sand.u32 %s40, 1
        %s141 = scalar_lea.sflag [#allocation3], %s140
        %s142 = sand.u32 %s40, 1
        %s143 = smul.addr %s142, 8
        %s144 = scalar_lea.vmem [#allocation2], %s143
        %p145 = pneg %p53
        %p146 = pneg %p50
        %p147 = pneg %p81
        %p148 = pneg %p78
        %s149 = sand.u32 %s68, 1
        %s150 = scalar_lea.sflag [#allocation4], %s149
        %s151 = sand.u32 %s68, 1
        %s152 = smul.addr %s151, 8
        %s153 = scalar_lea.vmem [#allocation5], %s152
        %v154 = vld [vmem:[%s134] sm:$0x3]
        %v155 = vld [vmem:[%s134 + $0x2] sm:$0x3]
        %v156 = vld [vmem:[%s134 + $0x4] sm:$0x3]
        %v157 = vld [vmem:[%s134 + $0x6] sm:$0x3]
        %v158 = vmul.f32 %v154, %v154
        %v159 = vmul.f32 %v155, %v155
        %v160 = vmul.f32 %v156, %v156
        %v161 = vmul.f32 %v157, %v157
        %vm162 = vcmask 1041408
        %v163 = vsel %vm162, %v158, 0.0
        %v164 = vsel %vm162, %v159, 0.0
        %v165 = vadd.f32 %v163, %v164
        %v166 = vsel %vm162, %v160, 0.0
        %v167 = vadd.f32 %v165, %v166
        %v168 = vsel %vm162, %v161, 0.0
        %v169 = vadd.f32 %v167, %v168
        %v170 = vrcp.pop 4.0
        %v171 = vmul.f32 4.0, %v170
        %v172 = vsub.f32 1.0, %v171
        %v173 = vmul.f32 %v170, %v172
        %v174 = vadd.f32 %v170, %v173
        %vm175 = vweird.f32 %v170
        %v176 = vsel %vm175, %v170, %v174
        %v177 = vmul.f32 %v169, %v176
        %v178 = vadd.f32 %v177, 1e-08
        %v179 = vrsqrt.pop %v178
        %v180 = vmul.f32 %v179, %v178
        %v181 = vmul.f32 %v180, %v179
        %v182 = vmul.f32 0.5, %v181
        %v183 = vsub.f32 1.5, %v182
        %v184 = vmul.f32 %v179, %v183
        %vm185 = vweird.f32 %v178
        %vm186 = vweird.f32 %v179
        %vm187 = vmor %vm185, %vm186
        %v188 = vsel %vm187, %v179, %v184
        %v189 = vmul.f32 %v154, %v188
        %v190 = vmul.f32 %v155, %v188
        %v191 = vmul.f32 %v156, %v188
        %v192 = vmul.f32 %v157, %v188
        %193 = vst [vmem:[%s153] sm:$0x3] %v189
        %194 = vst [vmem:[%s153 + $0x2] sm:$0x3] %v190
        %195 = vst [vmem:[%s153 + $0x4] sm:$0x3] %v191
        %196 = vst [vmem:[%s153 + $0x6] sm:$0x3] %v192
        %s197 = sand.u32 %s68, 1
        %s198 = scalar_lea.sflag [#allocation4], %s197
        %s199 = sand.u32 %s68, 1
        %s200 = smul.addr %s199, 8
        %s201 = scalar_lea.vmem [#allocation5], %s200
        // Predicated region
        $region29: #{tpu_custom_call.1} parent=23 // pred_check
          %p202 = pneg %p78
        $region30: #{tpu_custom_call.1} parent=23 // pred_check_branch
          %204 = sbr.rel (%p202) target = $region32
        $region31: #{tpu_custom_call.1} parent=23 // pred_region
          %206 = vsyncadd %s198, 0
          %s207 = smul.addr %s22, 4
          %s208 = sadd.s32 %s23, %s207
          %s209 = smul.addr %s208, 2
          %s210 = scalar_lea.hbm %s1, %s209
          %s211 = sshll.u32 %s201, 4
          %s212 = int_to_ptr.vmem [resolvable:$true] %s211
          %s213 = sshll.u32 %s210, 4
          %s214 = int_to_ptr.hbm [resolvable:$true] %s213
          %219 = dma.vmem_to_hbm [thread:$0]  %s212, 128, %s214, %s198, 32, 32, 2
        $region32: #{tpu_custom_call.1} parent=23 // pred_fallthru
          _
      $region24: #{tpu_custom_call.1} parent=5 // pred_fallthru
        _
      %p220 = scmp.le.s32.totalorder 2, %s13
      // Predicated region
      $region33: #{tpu_custom_call.1} parent=5 // pred_check
        %p221 = pneg %p220
      $region34: #{tpu_custom_call.1} parent=5 // pred_check_branch
        %223 = sbr.rel (%p221) target = $region36
      $region35: #{tpu_custom_call.1} parent=5 // pred_region
        %s224 = ssub.s32 %s13, 2
        // Predicated region
        $region37: #{tpu_custom_call.1} parent=35 // pred_check
          %p225 = pneg %p84
        $region38: #{tpu_custom_call.1} parent=35 // pred_check_branch
          %227 = sbr.rel (%p225) target = $region40
        $region39: #{tpu_custom_call.1} parent=35 // pred_region
          %s228 = sand.u32 %s69, 1
          %s229 = scalar_lea.sflag [#allocation4], %s228
          %s230 = sand.u32 %s69, 1
          %s231 = smul.addr %s230, 8
          %s232 = scalar_lea.vmem [#allocation5], %s231
          %234 = dma.done %s229, 128
        $region40: #{tpu_custom_call.1} parent=35 // pred_fallthru
          _
      $region36: #{tpu_custom_call.1} parent=5 // pred_fallthru
        _
    $region6: #{tpu_custom_call.1} parent=1 // loop_footer
      %s17 = sadd.s32 1, %s13
    $region7: #{tpu_custom_call.1} parent=1 // loop_footer_branch
      %12 = sbr.rel target = $region3
    $region8: #{tpu_custom_call.1} parent=1 // loop_exit
      _
    %235 = vsyncpa [#allocation3], 1
    %s236 = scalar_lea.sflag [#allocation3], 1
    %237 = vsyncpa %s236, 1
    %238 = vsyncpa [#allocation4], 1
    %s239 = scalar_lea.sflag [#allocation4], 1
    %240 = vsyncpa %s239, 1

</llo_original>
